<compile_context>
chip_gen: v5e
topology: v5e:2x2
jax: 0.10.0
libtpu: 0.0.40
codegen_flags: <defaults>
</compile_context>

<pallas_src>
import jax
import jax.numpy as jnp
from jax.experimental import pallas as pl
from jax.experimental.pallas import tpu as pltpu


def _round_up(n, m):
    return ((n + m - 1) // m) * m


def mlp_kernel(x_ref, w1_ref, b1_ref, w2_ref, b2_ref, w3_ref, b3_ref, o_ref):
    # fc1 + relu  (bf16 MXU operands, f32 accumulation / bias / activation)
    x = x_ref[...].astype(jnp.bfloat16)
    h1 = jnp.dot(x, w1_ref[...], preferred_element_type=jnp.float32)
    h1 = jnp.maximum(h1 + b1_ref[...], 0.0)
    # fc2 + relu
    h2 = jnp.dot(h1.astype(jnp.bfloat16), w2_ref[...],
                 preferred_element_type=jnp.float32)
    h2 = jnp.maximum(h2 + b2_ref[...], 0.0)
    # fc3 (no activation); lane-dense padded output slab, stored as bf16
    out = jnp.dot(h2.astype(jnp.bfloat16), w3_ref[...],
                  preferred_element_type=jnp.float32)
    o_ref[...] = (out + b3_ref[...]).astype(o_ref.dtype)


def prepare_params(params):
    """One-time weight padding & bf16 casting (hoisted off the forward path).

    params: dict with w1 (in,128), b1 (1,128), w2 (128,256), b2 (1,256),
            w3 (256,out), b3 (1,out)  -- weights already transposed vs nn.Linear.
    """
    bf16, f32 = jnp.bfloat16, jnp.float32
    hidden2, out_dim = params["w3"].shape
    out_p = _round_up(out_dim, 128)                    # lane-dense output slab
    w3 = jnp.zeros((hidden2, out_p), bf16).at[:, :out_dim].set(
        params["w3"].astype(bf16))
    b3 = jnp.zeros((1, out_p), f32).at[:, :out_dim].set(
        params["b3"].astype(f32))
    return {
        "w1": params["w1"].astype(bf16),
        "b1": params["b1"].astype(f32),
        "w2": params["w2"].astype(bf16),
        "b2": params["b2"].astype(f32),
        "w3": w3,
        "b3": b3,
        "out_dim": out_dim,
    }


def phone_price_model(x, prep, *, tile_b=1024):
    """Forward pass of PhonePriceModel using pre-prepared (padded/bf16) params."""
    B, input_dim = x.shape
    hidden1 = prep["w1"].shape[1]
    hidden2 = prep["w2"].shape[1]
    out_p = prep["w3"].shape[1]
    out_dim = prep["out_dim"]

    # Batch tiling: multiples of 16 (bf16 sublane packing). Small batches run
    # as a single grid step; large batches keep >=2 parallel steps so the
    # "parallel" axis can be sharded over both v7x TensorCores.
    tile_b = _round_up(tile_b, 16)
    B16 = _round_up(B, 16)
    tb = min(tile_b, B16)
    half = _round_up((B16 + 1) // 2, 16)
    if tb > half and half >= 512:
        tb = half
    B_p = _round_up(B, tb)
    if B_p != B:                      # only pads when batch isn't tile-aligned
        x = jnp.pad(x, ((0, B_p - B), (0, 0)))
    grid = (B_p // tb,)

    # x streams in raw f32 tiles; all parameters are resident (constant index
    # map => Pallas skips re-DMA between grid steps).
    in_specs = [
        pl.BlockSpec((tb, input_dim), lambda i: (i, 0)),      # x (raw f32)
        pl.BlockSpec((input_dim, hidden1), lambda i: (0, 0)),  # w1
        pl.BlockSpec((1, hidden1), lambda i: (0, 0)),          # b1
        pl.BlockSpec((hidden1, hidden2), lambda i: (0, 0)),    # w2
        pl.BlockSpec((1, hidden2), lambda i: (0, 0)),          # b2
        pl.BlockSpec((hidden2, out_p), lambda i: (0, 0)),      # w3
        pl.BlockSpec((1, out_p), lambda i: (0, 0)),            # b3
    ]
    out_specs = pl.BlockSpec((tb, out_p), lambda i: (i, 0))

    flops = 2 * B_p * (input_dim * hidden1 + hidden1 * hidden2 + hidden2 * out_p)
    bytes_accessed = (
        B_p * input_dim * 4                                   # x (f32)
        + (prep["w1"].size + prep["w2"].size + prep["w3"].size) * 2
        + (prep["b1"].size + prep["b2"].size + prep["b3"].size) * 4
        + B_p * out_p * 2)                                    # out (bf16)

    compiler_kwargs = dict(dimension_semantics=("parallel",))
    # Rough double-buffered VMEM footprint; raise the scoped limit only when an
    # oversized tile would exceed the v5e 16 MiB default.
    vmem_est = (2 * tb * input_dim * 4 + 2 * tb * out_p * 2
                + tb * (hidden1 + hidden2) * 4
                + (prep["w1"].size + prep["w2"].size + prep["w3"].size) * 2
                + (prep["b1"].size + prep["b2"].size + prep["b3"].size) * 4)
    if vmem_est > 12 * 1024 * 1024:
        compiler_kwargs["vmem_limit_bytes"] = min(
            2 * vmem_est, 100 * 1024 * 1024)

    out = pl.pallas_call(
        mlp_kernel,
        out_shape=jax.ShapeDtypeStruct((B_p, out_p), jnp.bfloat16),
        grid=grid,
        in_specs=in_specs,
        out_specs=out_specs,
        compiler_params=pltpu.CompilerParams(**compiler_kwargs),
        cost_estimate=pl.CostEstimate(
            flops=flops, transcendentals=0, bytes_accessed=bytes_accessed),
    )(x, prep["w1"], prep["b1"], prep["w2"], prep["b2"], prep["w3"], prep["b3"])

    return out[:B, :out_dim].astype(jnp.float32)


def init_params(key, input_dim, out_dim):
    """Deterministic synthetic parameters (shapes match the nn.Linear layers)."""
    k1, k2, k3, k4, k5, k6 = jax.random.split(key, 6)
    scale = 0.05
    return {
        "w1": scale * jax.random.normal(k1, (input_dim, 128), jnp.float32),
        "b1": scale * jax.random.normal(k2, (1, 128), jnp.float32),
        "w2": scale * jax.random.normal(k3, (128, 256), jnp.float32),
        "b2": scale * jax.random.normal(k4, (1, 256), jnp.float32),
        "w3": scale * jax.random.normal(k5, (256, out_dim), jnp.float32),
        "b3": scale * jax.random.normal(k6, (1, out_dim), jnp.float32),
    }


def reference_forward(x, p):
    # Mirrors the kernel numerics: bf16 matmul operands, f32 accumulation,
    # bf16 final store.
    bf16, f32 = jnp.bfloat16, jnp.float32
    h1 = jnp.maximum(
        jnp.dot(x.astype(bf16), p["w1"].astype(bf16),
                preferred_element_type=f32) + p["b1"], 0.0)
    h2 = jnp.maximum(
        jnp.dot(h1.astype(bf16), p["w2"].astype(bf16),
                preferred_element_type=f32) + p["b2"], 0.0)
    out = jnp.dot(h2.astype(bf16), p["w3"].astype(bf16),
                  preferred_element_type=f32) + p["b3"]
    return out.astype(bf16).astype(f32)


if __name__ == "__main__":
    # Phone price dataset: 20 features, 4 price classes.
    INPUT_DIM = 20
    OUT_DIM = 4
    BATCH = 16

    key = jax.random.PRNGKey(0)
    kx, kp = jax.random.split(key)
    x = jax.random.normal(kx, (BATCH, INPUT_DIM), jnp.float32)
    params = init_params(kp, INPUT_DIM, OUT_DIM)
    prep = prepare_params(params)          # one-time weight pad/cast

    out = phone_price_model(x, prep)
    out = jax.block_until_ready(out)

    ref = reference_forward(x, params)
    assert out.shape == (BATCH, OUT_DIM)
    err = float(jnp.max(jnp.abs(out - ref)))
    # bf16 output store => allow one bf16 ULP of rounding difference.
    assert err < 2e-2, err

    print("KERNEL_OK")
</pallas_src>

<mosaic_0001>
module attributes {stable_mosaic.version = 11 : i64} {
  func.func @mlp_kernel(%arg0: i32, %arg1: memref<16x20xf32, #tpu.memory_space<vmem>>, %arg2: memref<20x128xbf16, #tpu.memory_space<vmem>>, %arg3: memref<1x128xf32, #tpu.memory_space<vmem>>, %arg4: memref<128x256xbf16, #tpu.memory_space<vmem>>, %arg5: memref<1x256xf32, #tpu.memory_space<vmem>>, %arg6: memref<256x128xbf16, #tpu.memory_space<vmem>>, %arg7: memref<1x128xf32, #tpu.memory_space<vmem>>, %arg8: memref<16x128xbf16, #tpu.memory_space<vmem>>) attributes {dimension_semantics = [#tpu.dimension_semantics<parallel>], iteration_bounds = array<i64: 1>, scalar_prefetch = 0 : i64, scratch_operands = 0 : i64, tpu.core_type = #tpu.core_type<tc>, window_params = [{transform_indices = @transform_0, window_bounds = array<i64: 16, 20>}, {pipeline_mode = #tpu.pipeline_mode<synchronous>, transform_indices = @transform_1, window_bounds = array<i64: 20, 128>}, {pipeline_mode = #tpu.pipeline_mode<synchronous>, transform_indices = @transform_2, window_bounds = array<i64: 1, 128>}, {pipeline_mode = #tpu.pipeline_mode<synchronous>, transform_indices = @transform_3, window_bounds = array<i64: 128, 256>}, {pipeline_mode = #tpu.pipeline_mode<synchronous>, transform_indices = @transform_4, window_bounds = array<i64: 1, 256>}, {pipeline_mode = #tpu.pipeline_mode<synchronous>, transform_indices = @transform_5, window_bounds = array<i64: 256, 128>}, {pipeline_mode = #tpu.pipeline_mode<synchronous>, transform_indices = @transform_6, window_bounds = array<i64: 1, 128>}, {transform_indices = @transform_7, window_bounds = array<i64: 16, 128>}]} {
    %c0 = arith.constant 0 : index
    %c0_0 = arith.constant 0 : index
    %0 = vector.load %arg1[%c0, %c0_0] : memref<16x20xf32, #tpu.memory_space<vmem>>, vector<16x20xf32>
    %1 = arith.truncf %0 : vector<16x20xf32> to vector<16x20xbf16>
    %c0_1 = arith.constant 0 : index
    %c0_2 = arith.constant 0 : index
    %2 = vector.load %arg2[%c0_1, %c0_2] : memref<20x128xbf16, #tpu.memory_space<vmem>>, vector<20x128xbf16>
    %cst = arith.constant dense<0.000000e+00> : vector<16x128xf32>
    %3 = tpu.matmul %1, %2, %cst {dimension_numbers = #tpu.dot_dimension_numbers<[1], [0], [0], [1], [0, 0, 1, 1], [], []>} : vector<16x20xbf16>, vector<20x128xbf16>, vector<16x128xf32> -> vector<16x128xf32>
    %c0_3 = arith.constant 0 : index
    %c0_4 = arith.constant 0 : index
    %4 = vector.load %arg3[%c0_3, %c0_4] : memref<1x128xf32, #tpu.memory_space<vmem>>, vector<1x128xf32>
    %5 = vector.broadcast %4 : vector<1x128xf32> to vector<16x128xf32>
    %6 = arith.addf %3, %5 : vector<16x128xf32>
    %cst_5 = arith.constant 0.000000e+00 : f32
    %7 = vector.broadcast %cst_5 : f32 to vector<16x128xf32>
    %8 = arith.maximumf %6, %7 : vector<16x128xf32>
    %9 = arith.truncf %8 : vector<16x128xf32> to vector<16x128xbf16>
    %c0_6 = arith.constant 0 : index
    %c0_7 = arith.constant 0 : index
    %10 = vector.load %arg4[%c0_6, %c0_7] : memref<128x256xbf16, #tpu.memory_space<vmem>>, vector<128x256xbf16>
    %cst_8 = arith.constant dense<0.000000e+00> : vector<16x256xf32>
    %11 = tpu.matmul %9, %10, %cst_8 {dimension_numbers = #tpu.dot_dimension_numbers<[1], [0], [0], [1], [0, 0, 1, 1], [], []>} : vector<16x128xbf16>, vector<128x256xbf16>, vector<16x256xf32> -> vector<16x256xf32>
    %c0_9 = arith.constant 0 : index
    %c0_10 = arith.constant 0 : index
    %12 = vector.load %arg5[%c0_9, %c0_10] : memref<1x256xf32, #tpu.memory_space<vmem>>, vector<1x256xf32>
    %13 = vector.broadcast %12 : vector<1x256xf32> to vector<16x256xf32>
    %14 = arith.addf %11, %13 : vector<16x256xf32>
    %cst_11 = arith.constant 0.000000e+00 : f32
    %15 = vector.broadcast %cst_11 : f32 to vector<16x256xf32>
    %16 = arith.maximumf %14, %15 : vector<16x256xf32>
    %17 = arith.truncf %16 : vector<16x256xf32> to vector<16x256xbf16>
    %c0_12 = arith.constant 0 : index
    %c0_13 = arith.constant 0 : index
    %18 = vector.load %arg6[%c0_12, %c0_13] : memref<256x128xbf16, #tpu.memory_space<vmem>>, vector<256x128xbf16>
    %cst_14 = arith.constant dense<0.000000e+00> : vector<16x128xf32>
    %19 = tpu.matmul %17, %18, %cst_14 {dimension_numbers = #tpu.dot_dimension_numbers<[1], [0], [0], [1], [0, 0, 1, 1], [], []>} : vector<16x256xbf16>, vector<256x128xbf16>, vector<16x128xf32> -> vector<16x128xf32>
    %c0_15 = arith.constant 0 : index
    %c0_16 = arith.constant 0 : index
    %20 = vector.load %arg7[%c0_15, %c0_16] : memref<1x128xf32, #tpu.memory_space<vmem>>, vector<1x128xf32>
    %21 = vector.broadcast %20 : vector<1x128xf32> to vector<16x128xf32>
    %22 = arith.addf %19, %21 : vector<16x128xf32>
    %23 = arith.truncf %22 : vector<16x128xf32> to vector<16x128xbf16>
    %c0_17 = arith.constant 0 : index
    %c0_18 = arith.constant 0 : index
    %24 = vector.load %arg8[%c0_17, %c0_18] : memref<16x128xbf16, #tpu.memory_space<vmem>>, vector<16x128xbf16>
    tpu.vector_store %arg8[%c0_17, %c0_18], %23 {strides = array<i32>} : memref<16x128xbf16, #tpu.memory_space<vmem>>, vector<16x128xbf16>,
    return
  }
  func.func @transform_0(%arg0: i32) -> (i32, i32) {
    %c0_i32 = arith.constant 0 : i32
    %c0_i32_0 = arith.constant 0 : i32
    return %arg0, %c0_i32 : i32, i32
  }
  func.func @transform_1(%arg0: i32) -> (i32, i32) {
    %c0_i32 = arith.constant 0 : i32
    %c0_i32_0 = arith.constant 0 : i32
    %c0_i32_1 = arith.constant 0 : i32
    return %c0_i32, %c0_i32_0 : i32, i32
  }
  func.func @transform_2(%arg0: i32) -> (i32, i32) {
    %c0_i32 = arith.constant 0 : i32
    %c0_i32_0 = arith.constant 0 : i32
    %c0_i32_1 = arith.constant 0 : i32
    return %c0_i32, %c0_i32_0 : i32, i32
  }
  func.func @transform_3(%arg0: i32) -> (i32, i32) {
    %c0_i32 = arith.constant 0 : i32
    %c0_i32_0 = arith.constant 0 : i32
    %c0_i32_1 = arith.constant 0 : i32
    return %c0_i32, %c0_i32_0 : i32, i32
  }
  func.func @transform_4(%arg0: i32) -> (i32, i32) {
    %c0_i32 = arith.constant 0 : i32
    %c0_i32_0 = arith.constant 0 : i32
    %c0_i32_1 = arith.constant 0 : i32
    return %c0_i32, %c0_i32_0 : i32, i32
  }
  func.func @transform_5(%arg0: i32) -> (i32, i32) {
    %c0_i32 = arith.constant 0 : i32
    %c0_i32_0 = arith.constant 0 : i32
    %c0_i32_1 = arith.constant 0 : i32
    return %c0_i32, %c0_i32_0 : i32, i32
  }
  func.func @transform_6(%arg0: i32) -> (i32, i32) {
    %c0_i32 = arith.constant 0 : i32
    %c0_i32_0 = arith.constant 0 : i32
    %c0_i32_1 = arith.constant 0 : i32
    return %c0_i32, %c0_i32_0 : i32, i32
  }
  func.func @transform_7(%arg0: i32) -> (i32, i32) {
    %c0_i32 = arith.constant 0 : i32
    %c0_i32_0 = arith.constant 0 : i32
    return %arg0, %c0_i32 : i32, i32
  }
}

</mosaic_0001>

<llo_original>
// kernel: tpu_custom_call.1
$region0: #{tpu_custom_call.1}
  #allocation0 [shape = 'u32[]', space=smem, size = 0x4, offset = 0x4, fixed_abs, tag = 'smem constant byte address 0x4 - core index']
  #allocation1 [shape = 'u32[72,128]{1,0:T(1,128)}', space=vmem, size = 0x9000, scoped, tag = 'internal scratch']
  %s0 = inlined_call_operand.hbm [shape: f32[16,20], index: 0, kind: input, shape index: {}]
  %s1 = inlined_call_operand.hbm [shape: bf16[20,128], index: 1, kind: input, shape index: {}]
  %s2 = inlined_call_operand.vmem [shape: f32[1,128], index: 2, kind: input, shape index: {}]
  %s3 = inlined_call_operand.hbm [shape: bf16[128,256], index: 3, kind: input, shape index: {}]
  %s4 = inlined_call_operand.vmem [shape: f32[1,256], index: 4, kind: input, shape index: {}]
  %s5 = inlined_call_operand.hbm [shape: bf16[256,128], index: 5, kind: input, shape index: {}]
  %s6 = inlined_call_operand.vmem [shape: f32[1,128], index: 6, kind: input, shape index: {}]
  %s7 = inlined_call_operand.hbm [shape: bf16[16,128], index: 7, kind: output, shape index: {}]
  %s8 = sld [smem:[#allocation0]]
  $region54: #{tpu_custom_call.1} parent=0
    _
  %s10 = ssub.s32 1, %s8
  %s11 = scalar_select 0, %s10, %s8
  $region1: #{tpu_custom_call.1} parent=0
    #allocation2 [shape = 'u8[8192]{0}', space=vmem, size = 0x2000, scoped, tag = 'input window, operand 0, single buffered']
    #allocation3 [shape = 's32[1]{0}', space=sflag, size = 0x4, scoped, tag = 'scoped memory for tpu_custom_call.1']
    #allocation4 [shape = 's32[1]{0}', space=sflag, size = 0x4, scoped, tag = 'scoped memory for tpu_custom_call.1']
    #allocation5 [shape = 'u8[6144]{0}', space=vmem, size = 0x1800, scoped, tag = 'input window, operand 1, single buffered']
    #allocation6 [shape = 's32[1]{0}', space=sflag, size = 0x4, scoped, tag = 'scoped memory for tpu_custom_call.1']
    #allocation7 [shape = 'u8[65536]{0}', space=vmem, size = 0x10000, scoped, tag = 'input window, operand 3, single buffered']
    #allocation8 [shape = 'u8[65536]{0}', space=vmem, size = 0x10000, scoped, tag = 'input window, operand 5, single buffered']
    #allocation9 [shape = 's32[1]{0}', space=sflag, size = 0x4, scoped, tag = 'scoped memory for tpu_custom_call.1']
    #allocation10 [shape = 'u8[4096]{0}', space=vmem, size = 0x1000, scoped, tag = 'output window, operand 0, single buffered']
    %12 = vsyncpa [#allocation3], 0
    %13 = vsyncpa [#allocation6], 0
    %14 = vsyncpa [#allocation9], 0
    %15 = vsyncpa [#allocation4], 0
    // Predicated region
    $region2: #{tpu_custom_call.1} parent=1 // pred_check
      _
    $region3: #{tpu_custom_call.1} parent=1 // pred_check_branch
      %17 = sbr.rel (0) target = $region5
    $region4: #{tpu_custom_call.1} parent=1 // pred_region
      %19 = vsyncadd [#allocation3], 0
      %s20 = sshll.u32 %s0, 4
      %s21 = int_to_ptr.hbm [resolvable:$true] %s20
      %s22 = sshll.u32 [#allocation2], 4
      %s23 = int_to_ptr.vmem [resolvable:$true] %s22
      %28 = dma.hbm_to_vmem [thread:$0]  %s21, 256, %s23, [#allocation3], 128, 128, 8
    $region5: #{tpu_custom_call.1} parent=1 // pred_fallthru
      _
    // Predicated region
    $region6: #{tpu_custom_call.1} parent=1 // pred_check
      _
    $region7: #{tpu_custom_call.1} parent=1 // pred_check_branch
      %30 = sbr.rel (0) target = $region9
    $region8: #{tpu_custom_call.1} parent=1 // pred_region
      %32 = vsyncadd [#allocation6], 0
      %s33 = sshll.u32 %s1, 4
      %s34 = int_to_ptr.hbm [resolvable:$true] %s33
      %s35 = sshll.u32 [#allocation5], 4
      %s36 = int_to_ptr.vmem [resolvable:$true] %s35
      %41 = dma.hbm_to_vmem [thread:$0]  %s34, 192, %s36, [#allocation6], 64, 64, 4
    $region9: #{tpu_custom_call.1} parent=1 // pred_fallthru
      _
    // Predicated region
    $region10: #{tpu_custom_call.1} parent=1 // pred_check
      _
    $region11: #{tpu_custom_call.1} parent=1 // pred_check_branch
      %43 = sbr.rel (0) target = $region13
    $region12: #{tpu_custom_call.1} parent=1 // pred_region
      _
    $region13: #{tpu_custom_call.1} parent=1 // pred_fallthru
      _
    // Predicated region
    $region14: #{tpu_custom_call.1} parent=1 // pred_check
      _
    $region15: #{tpu_custom_call.1} parent=1 // pred_check_branch
      %45 = sbr.rel (0) target = $region17
    $region16: #{tpu_custom_call.1} parent=1 // pred_region
      %47 = vsyncadd [#allocation6], 0
      %s48 = sshll.u32 %s3, 4
      %s49 = int_to_ptr.hbm [resolvable:$true] %s48
      %s50 = sshll.u32 [#allocation7], 4
      %s51 = int_to_ptr.vmem [resolvable:$true] %s50
      %56 = dma.hbm_to_vmem [thread:$0]  %s49, 2048, %s51, [#allocation6], 128, 128, 8
    $region17: #{tpu_custom_call.1} parent=1 // pred_fallthru
      _
    // Predicated region
    $region18: #{tpu_custom_call.1} parent=1 // pred_check
      _
    $region19: #{tpu_custom_call.1} parent=1 // pred_check_branch
      %58 = sbr.rel (0) target = $region21
    $region20: #{tpu_custom_call.1} parent=1 // pred_region
      _
    $region21: #{tpu_custom_call.1} parent=1 // pred_fallthru
      _
    // Predicated region
    $region22: #{tpu_custom_call.1} parent=1 // pred_check
      _
    $region23: #{tpu_custom_call.1} parent=1 // pred_check_branch
      %60 = sbr.rel (0) target = $region25
    $region24: #{tpu_custom_call.1} parent=1 // pred_region
      %62 = vsyncadd [#allocation9], 0
      %s63 = sshll.u32 %s5, 4
      %s64 = int_to_ptr.hbm [resolvable:$true] %s63
      %s65 = sshll.u32 [#allocation8], 4
      %s66 = int_to_ptr.vmem [resolvable:$true] %s65
      %71 = dma.hbm_to_vmem [thread:$0]  %s64, 2048, %s66, [#allocation9], 64, 64, 4
    $region25: #{tpu_custom_call.1} parent=1 // pred_fallthru
      _
    // Predicated region
    $region26: #{tpu_custom_call.1} parent=1 // pred_check
      _
    $region27: #{tpu_custom_call.1} parent=1 // pred_check_branch
      %73 = sbr.rel (0) target = $region29
    $region28: #{tpu_custom_call.1} parent=1 // pred_region
      _
    $region29: #{tpu_custom_call.1} parent=1 // pred_fallthru
      _
    // Predicated region
    $region30: #{tpu_custom_call.1} parent=1 // pred_check
      _
    $region31: #{tpu_custom_call.1} parent=1 // pred_check_branch
      %75 = sbr.rel (0) target = $region33
    $region32: #{tpu_custom_call.1} parent=1 // pred_region
      %77 = dma.done [#allocation3], 256
    $region33: #{tpu_custom_call.1} parent=1 // pred_fallthru
      _
    // Predicated region
    $region34: #{tpu_custom_call.1} parent=1 // pred_check
      _
    $region35: #{tpu_custom_call.1} parent=1 // pred_check_branch
      %79 = sbr.rel (0) target = $region37
    $region36: #{tpu_custom_call.1} parent=1 // pred_region
      %81 = dma.done [#allocation6], 192
    $region37: #{tpu_custom_call.1} parent=1 // pred_fallthru
      _
    // Predicated region
    $region38: #{tpu_custom_call.1} parent=1 // pred_check
      _
    $region39: #{tpu_custom_call.1} parent=1 // pred_check_branch
      %83 = sbr.rel (0) target = $region41
    $region40: #{tpu_custom_call.1} parent=1 // pred_region
      %85 = dma.done [#allocation6], 2048
    $region41: #{tpu_custom_call.1} parent=1 // pred_fallthru
      _
    // Predicated region
    $region42: #{tpu_custom_call.1} parent=1 // pred_check
      _
    $region43: #{tpu_custom_call.1} parent=1 // pred_check_branch
      %87 = sbr.rel (0) target = $region45
    $region44: #{tpu_custom_call.1} parent=1 // pred_region
      %89 = dma.done [#allocation9], 2048
    $region45: #{tpu_custom_call.1} parent=1 // pred_fallthru
      _
    %v91 = vld [vmem:[#allocation2] sm:$0xff]
    %v92 = vld [vmem:[#allocation2 + $0x8] sm:$0xff]
    %v93 = vpack.c.bf16 %v92, %v91
    %v94 = vld [vmem:[#allocation5] sm:$0xf]
    %v95 = vld [vmem:[#allocation5 + $0x4] sm:$0xf]
    %v96 = vld [vmem:[#allocation5 + $0x8] sm:$0x3]
    %v97 = vld [vmem:[%s2] sm:$0x1]
    %v99 = vperm.slane %v97, 0
    %v104 = vunpack.c.l.b16 %v94
    %v105 = vunpack.c.l.b16 %v95
    %v106 = vunpack.c.l.b16 %v96
    %v107 = vpack.c.b16 %v105, %v104
    %v108 = vpack.c.b16 %v106, %v106
    %vm110 = vcmask 162816
    %v112 = vsel %vm110, %v93, 0
    %vm114 = vcmask 1041408
    %v116 = vsel %vm114, %v108, 0
    %118 = vmatpush.bf16.msra.mxu0 0
    %119 = vmatpush.bf16.msra.mxu0 0
    %120 = vmatpush.bf16.msra.mxu0 0
    %121 = vmatpush.bf16.msra.mxu0 0
    %122 = vmatpush.bf16.msra.mxu0 0
    %123 = vmatpush.bf16.msra.mxu0 0
    %124 = vmatpush.bf16.msra.mxu0 %v116
    %125 = vmatpush.bf16.msra.mxu0 %v107
    %126 = vmatmul.bf16.gmra.mxu0 %v112
    %v127 = vpop.f32.mrf.mxu0
    %v128 = vadd.f32 %v99, %v127
    %v129 = vpop.f32.mrf.mxu0
    %v130 = vadd.f32 %v99, %v129
    %131 = vdwg.mxu0
    %v132 = vmax.f32 %v128, 0.0
    %v133 = vmax.f32 %v130, 0.0
    %v134 = vpack.c.bf16 %v133, %v132
    %v135 = vld [vmem:[#allocation7] sm:$0xff]
    %v136 = vld [vmem:[#allocation7 + $0x8] sm:$0xff]
    %v137 = vld [vmem:[#allocation7 + $0x10] sm:$0xff]
    %v138 = vld [vmem:[#allocation7 + $0x18] sm:$0xff]
    %v139 = vld [vmem:[#allocation7 + $0x20] sm:$0xff]
    %v140 = vld [vmem:[#allocation7 + $0x28] sm:$0xff]
    %v141 = vld [vmem:[#allocation7 + $0x30] sm:$0xff]
    %v142 = vld [vmem:[#allocation7 + $0x38] sm:$0xff]
    %v143 = vld [vmem:[#allocation7 + $0x40] sm:$0xff]
    %v144 = vld [vmem:[#allocation7 + $0x48] sm:$0xff]
    %v145 = vld [vmem:[#allocation7 + $0x50] sm:$0xff]
    %v146 = vld [vmem:[#allocation7 + $0x58] sm:$0xff]
    %v147 = vld [vmem:[#allocation7 + $0x60] sm:$0xff]
    %v148 = vld [vmem:[#allocation7 + $0x68] sm:$0xff]
    %v149 = vld [vmem:[#allocation7 + $0x70] sm:$0xff]
    %v150 = vld [vmem:[#allocation7 + $0x78] sm:$0xff]
    %v151 = vld [vmem:[%s4] sm:$0x3]
    %v153 = vperm.slane %v151, 0
    %v154 = vperm.slane %v151, 1
    %v173 = vunpack.c.l.b16 %v135
    %v174 = vunpack.c.h.b16 %v135
    %v175 = vunpack.c.l.b16 %v136
    %v176 = vunpack.c.h.b16 %v136
    %v177 = vunpack.c.l.b16 %v137
    %v178 = vunpack.c.h.b16 %v137
    %v179 = vunpack.c.l.b16 %v138
    %v180 = vunpack.c.h.b16 %v138
    %v181 = vunpack.c.l.b16 %v139
    %v182 = vunpack.c.h.b16 %v139
    %v183 = vunpack.c.l.b16 %v140
    %v184 = vunpack.c.h.b16 %v140
    %v185 = vunpack.c.l.b16 %v141
    %v186 = vunpack.c.h.b16 %v141
    %v187 = vunpack.c.l.b16 %v142
    %v188 = vunpack.c.h.b16 %v142
    %v189 = vunpack.c.l.b16 %v143
    %v190 = vunpack.c.h.b16 %v143
    %v191 = vunpack.c.l.b16 %v144
    %v192 = vunpack.c.h.b16 %v144
    %v193 = vunpack.c.l.b16 %v145
    %v194 = vunpack.c.h.b16 %v145
    %v195 = vunpack.c.l.b16 %v146
    %v196 = vunpack.c.h.b16 %v146
    %v197 = vunpack.c.l.b16 %v147
    %v198 = vunpack.c.h.b16 %v147
    %v199 = vunpack.c.l.b16 %v148
    %v200 = vunpack.c.h.b16 %v148
    %v201 = vunpack.c.l.b16 %v149
    %v202 = vunpack.c.h.b16 %v149
    %v203 = vunpack.c.l.b16 %v150
    %v204 = vunpack.c.h.b16 %v150
    %v205 = vpack.c.b16 %v175, %v173
    %v206 = vpack.c.b16 %v176, %v174
    %v207 = vpack.c.b16 %v179, %v177
    %v208 = vpack.c.b16 %v180, %v178
    %v209 = vpack.c.b16 %v183, %v181
    %v210 = vpack.c.b16 %v184, %v182
    %v211 = vpack.c.b16 %v187, %v185
    %v212 = vpack.c.b16 %v188, %v186
    %v213 = vpack.c.b16 %v191, %v189
    %v214 = vpack.c.b16 %v192, %v190
    %v215 = vpack.c.b16 %v195, %v193
    %v216 = vpack.c.b16 %v196, %v194
    %v217 = vpack.c.b16 %v199, %v197
    %v218 = vpack.c.b16 %v200, %v198
    %v219 = vpack.c.b16 %v203, %v201
    %v220 = vpack.c.b16 %v204, %v202
    %237 = vmatpush.bf16.msra.mxu0 %v219
    %238 = vmatpush.bf16.msra.mxu0 %v217
    %239 = vmatpush.bf16.msra.mxu0 %v215
    %240 = vmatpush.bf16.msra.mxu0 %v213
    %241 = vmatpush.bf16.msra.mxu0 %v211
    %242 = vmatpush.bf16.msra.mxu0 %v209
    %243 = vmatpush.bf16.msra.mxu0 %v207
    %244 = vmatpush.bf16.msra.mxu0 %v205
    %245 = vmatmul.bf16.gmra.mxu0 %v134
    %v246 = vpop.f32.mrf.mxu0
    %v247 = vadd.f32 %v153, %v246
    %v248 = vpop.f32.mrf.mxu0
    %v249 = vadd.f32 %v153, %v248
    %250 = vdwg.mxu0
    %251 = vmatpush.bf16.msra.mxu0 %v220
    %252 = vmatpush.bf16.msra.mxu0 %v218
    %253 = vmatpush.bf16.msra.mxu0 %v216
    %254 = vmatpush.bf16.msra.mxu0 %v214
    %255 = vmatpush.bf16.msra.mxu0 %v212
    %256 = vmatpush.bf16.msra.mxu0 %v210
    %257 = vmatpush.bf16.msra.mxu0 %v208
    %258 = vmatpush.bf16.msra.mxu0 %v206
    %259 = vmatmul.bf16.gmra.mxu0 %v134
    %v260 = vpop.f32.mrf.mxu0
    %v261 = vadd.f32 %v154, %v260
    %v262 = vpop.f32.mrf.mxu0
    %v263 = vadd.f32 %v154, %v262
    %264 = vdwg.mxu0
    %v265 = vmax.f32 %v247, 0.0
    %v266 = vmax.f32 %v261, 0.0
    %v267 = vmax.f32 %v249, 0.0
    %v268 = vmax.f32 %v263, 0.0
    %v269 = vpack.c.bf16 %v267, %v265
    %v270 = vpack.c.bf16 %v268, %v266
    %v271 = vld [vmem:[#allocation8] sm:$0xf]
    %v272 = vld [vmem:[#allocation8 + $0x4] sm:$0xf]
    %v273 = vld [vmem:[#allocation8 + $0x8] sm:$0xf]
    %v274 = vld [vmem:[#allocation8 + $0xc] sm:$0xf]
    %v275 = vld [vmem:[#allocation8 + $0x10] sm:$0xf]
    %v276 = vld [vmem:[#allocation8 + $0x14] sm:$0xf]
    %v277 = vld [vmem:[#allocation8 + $0x18] sm:$0xf]
    %v278 = vld [vmem:[#allocation8 + $0x1c] sm:$0xf]
    %v279 = vld [vmem:[#allocation8 + $0x20] sm:$0xf]
    %v280 = vld [vmem:[#allocation8 + $0x24] sm:$0xf]
    %v281 = vld [vmem:[#allocation8 + $0x28] sm:$0xf]
    %v282 = vld [vmem:[#allocation8 + $0x2c] sm:$0xf]
    %v283 = vld [vmem:[#allocation8 + $0x30] sm:$0xf]
    %v284 = vld [vmem:[#allocation8 + $0x34] sm:$0xf]
    %v285 = vld [vmem:[#allocation8 + $0x38] sm:$0xf]
    %v286 = vld [vmem:[#allocation8 + $0x3c] sm:$0xf]
    %v287 = vld [vmem:[#allocation8 + $0x40] sm:$0xf]
    %v288 = vld [vmem:[#allocation8 + $0x44] sm:$0xf]
    %v289 = vld [vmem:[#allocation8 + $0x48] sm:$0xf]
    %v290 = vld [vmem:[#allocation8 + $0x4c] sm:$0xf]
    %v291 = vld [vmem:[#allocation8 + $0x50] sm:$0xf]
    %v292 = vld [vmem:[#allocation8 + $0x54] sm:$0xf]
    %v293 = vld [vmem:[#allocation8 + $0x58] sm:$0xf]
    %v294 = vld [vmem:[#allocation8 + $0x5c] sm:$0xf]
    %v295 = vld [vmem:[#allocation8 + $0x60] sm:$0xf]
    %v296 = vld [vmem:[#allocation8 + $0x64] sm:$0xf]
    %v297 = vld [vmem:[#allocation8 + $0x68] sm:$0xf]
    %v298 = vld [vmem:[#allocation8 + $0x6c] sm:$0xf]
    %v299 = vld [vmem:[#allocation8 + $0x70] sm:$0xf]
    %v300 = vld [vmem:[#allocation8 + $0x74] sm:$0xf]
    %v301 = vld [vmem:[#allocation8 + $0x78] sm:$0xf]
    %v302 = vld [vmem:[#allocation8 + $0x7c] sm:$0xf]
    %v303 = vld [vmem:[%s6] sm:$0x1]
    %v305 = vperm.slane %v303, 0
    %v339 = vunpack.c.l.b16 %v271
    %v340 = vunpack.c.l.b16 %v272
    %v341 = vunpack.c.l.b16 %v273
    %v342 = vunpack.c.l.b16 %v274
    %v343 = vunpack.c.l.b16 %v275
    %v344 = vunpack.c.l.b16 %v276
    %v345 = vunpack.c.l.b16 %v277
    %v346 = vunpack.c.l.b16 %v278
    %v347 = vunpack.c.l.b16 %v279
    %v348 = vunpack.c.l.b16 %v280
    %v349 = vunpack.c.l.b16 %v281
    %v350 = vunpack.c.l.b16 %v282
    %v351 = vunpack.c.l.b16 %v283
    %v352 = vunpack.c.l.b16 %v284
    %v353 = vunpack.c.l.b16 %v285
    %v354 = vunpack.c.l.b16 %v286
    %v355 = vunpack.c.l.b16 %v287
    %v356 = vunpack.c.l.b16 %v288
    %v357 = vunpack.c.l.b16 %v289
    %v358 = vunpack.c.l.b16 %v290
    %v359 = vunpack.c.l.b16 %v291
    %v360 = vunpack.c.l.b16 %v292
    %v361 = vunpack.c.l.b16 %v293
    %v362 = vunpack.c.l.b16 %v294
    %v363 = vunpack.c.l.b16 %v295
    %v364 = vunpack.c.l.b16 %v296
    %v365 = vunpack.c.l.b16 %v297
    %v366 = vunpack.c.l.b16 %v298
    %v367 = vunpack.c.l.b16 %v299
    %v368 = vunpack.c.l.b16 %v300
    %v369 = vunpack.c.l.b16 %v301
    %v370 = vunpack.c.l.b16 %v302
    %v371 = vpack.c.b16 %v340, %v339
    %v372 = vpack.c.b16 %v342, %v341
    %v373 = vpack.c.b16 %v344, %v343
    %v374 = vpack.c.b16 %v346, %v345
    %v375 = vpack.c.b16 %v348, %v347
    %v376 = vpack.c.b16 %v350, %v349
    %v377 = vpack.c.b16 %v352, %v351
    %v378 = vpack.c.b16 %v354, %v353
    %v379 = vpack.c.b16 %v356, %v355
    %v380 = vpack.c.b16 %v358, %v357
    %v381 = vpack.c.b16 %v360, %v359
    %v382 = vpack.c.b16 %v362, %v361
    %v383 = vpack.c.b16 %v364, %v363
    %v384 = vpack.c.b16 %v366, %v365
    %v385 = vpack.c.b16 %v368, %v367
    %v386 = vpack.c.b16 %v370, %v369
    %403 = vmatpush.bf16.msra.mxu0 %v378
    %404 = vmatpush.bf16.msra.mxu0 %v377
    %405 = vmatpush.bf16.msra.mxu0 %v376
    %406 = vmatpush.bf16.msra.mxu0 %v375
    %407 = vmatpush.bf16.msra.mxu0 %v374
    %408 = vmatpush.bf16.msra.mxu0 %v373
    %409 = vmatpush.bf16.msra.mxu0 %v372
    %410 = vmatpush.bf16.msra.mxu0 %v371
    %411 = vmatmul.bf16.gmra.mxu0 %v269
    %v412 = vpop.f32.mrf.mxu0
    %v413 = vadd.f32 %v305, %v412
    %v414 = vpop.f32.mrf.mxu0
    %v415 = vadd.f32 %v305, %v414
    %416 = vdwg.mxu0
    %417 = vmatpush.bf16.msra.mxu0 %v386
    %418 = vmatpush.bf16.msra.mxu0 %v385
    %419 = vmatpush.bf16.msra.mxu0 %v384
    %420 = vmatpush.bf16.msra.mxu0 %v383
    %421 = vmatpush.bf16.msra.mxu0 %v382
    %422 = vmatpush.bf16.msra.mxu0 %v381
    %423 = vmatpush.bf16.msra.mxu0 %v380
    %424 = vmatpush.bf16.msra.mxu0 %v379
    %425 = vmatmul.bf16.gmra.mxu0 %v270
    %v426 = vpop.f32.mrf.mxu0
    %v427 = vadd.f32 %v413, %v426
    %v428 = vpop.f32.mrf.mxu0
    %v429 = vadd.f32 %v415, %v428
    %430 = vdwg.mxu0
    %v431 = vpack.c.bf16 %v427, %v427
    %v432 = vpack.c.bf16 %v429, %v429
    %433 = vst [vmem:[#allocation10] sm:$0xf] %v431
    %434 = vst [vmem:[#allocation10 + $0x4] sm:$0xf] %v432
    // Predicated region
    $region46: #{tpu_custom_call.1} parent=1 // pred_check
      _
    $region47: #{tpu_custom_call.1} parent=1 // pred_check_branch
      %436 = sbr.rel (0) target = $region49
    $region48: #{tpu_custom_call.1} parent=1 // pred_region
      %438 = vsyncadd [#allocation4], 0
      %s439 = sshll.u32 [#allocation10], 4
      %s440 = int_to_ptr.vmem [resolvable:$true] %s439
      %s441 = sshll.u32 %s7, 4
      %s442 = int_to_ptr.hbm [resolvable:$true] %s441
      %447 = dma.vmem_to_hbm [thread:$0]  %s440, 128, %s442, [#allocation4], 64, 64, 4
    $region49: #{tpu_custom_call.1} parent=1 // pred_fallthru
      _
    // Predicated region
    $region50: #{tpu_custom_call.1} parent=1 // pred_check
      _
    $region51: #{tpu_custom_call.1} parent=1 // pred_check_branch
      %449 = sbr.rel (0) target = $region53
    $region52: #{tpu_custom_call.1} parent=1 // pred_region
      %451 = dma.done [#allocation4], 128
    $region53: #{tpu_custom_call.1} parent=1 // pred_fallthru
      _
    %452 = vsyncpa [#allocation3], 1
    %453 = vsyncpa [#allocation6], 1
    %454 = vsyncpa [#allocation9], 1
    %455 = vsyncpa [#allocation4], 1

</llo_original>
